<compile_context>
chip_gen: v6e
topology: v6e:2x2x1
jax: 0.10.0
libtpu: 0.0.40
codegen_flags: <defaults>
</compile_context>

<pallas_src>
import functools
import math

import jax
import jax.numpy as jnp
from jax.experimental import pallas as pl
from jax.experimental.pallas import tpu as pltpu


# ------------------------- positional-encoding table -------------------------

def make_pe_table(max_seq_len, d_model, dtype=jnp.float32):
    """Vectorized, numerically identical construction of the PyTorch pe buffer."""
    pos = jnp.arange(max_seq_len, dtype=jnp.float32)[:, None]          # (S, 1)
    k = jnp.arange(d_model, dtype=jnp.float32)[None, :]                # (1, D)
    angle = pos / jnp.power(10000.0, 2.0 * k / float(d_model))         # (S, D)
    even = (jnp.arange(d_model) % 2 == 0)[None, :]                     # (1, D)
    pe = jnp.where(even, jnp.sin(angle), jnp.cos(angle))
    return pe.astype(dtype)                                            # (S, D)


# -------------------------------- Pallas kernel -------------------------------

def _pos_enc_kernel(x_ref, pe_ref, o_ref, *, scale):
    # x_ref: (bb, tl, E), pe_ref: (tl, E) -> pe broadcast over the bb batch rows.
    o_ref[...] = x_ref[...] * scale + pe_ref[...]


def _pick_tiles(N, L, E, bytes_per_elem=4, target_block_bytes=2 * 1024 * 1024):
    """Pick (batch_block, seq_tile) so one x block is ~2 MiB.

    Total double-buffered footprint (x + out + pe blocks, x2 buffers) stays
    <= ~12 MiB, well inside the 32 MiB vmem_limit set below on every generation.
    """
    rows = max(1, target_block_bytes // (E * bytes_per_elem))
    if rows >= L:
        tl = L                                   # full seq dim -> always legal
        bb = max(1, min(N, rows // max(L, 1)))   # pack batch rows to fill block
    else:
        tl = max(8, (rows // 8) * 8)             # multiple of 8 when tiling
        bb = 1
    return bb, tl


def positional_encoder_forward(x, pe, d_model):
    """x: (N, L, E) f32; pe: (max_seq_len, E) f32.  Returns (N, L, E)."""
    N, L, E = x.shape
    assert E == d_model
    assert pe.shape[0] >= L and pe.shape[1] == E
    scale = math.sqrt(d_model)

    # ---- lane-dense fold: pack k sequence rows into the 128-lane dim ----------
    k = 1
    if E < 128 and 128 % E == 0:
        kf = 128 // E
        if L % kf == 0 and pe.shape[0] % kf == 0:
            k = kf
    L_eff, E_eff = L // k, E * k
    x_f = x.reshape(N, L_eff, E_eff) if k > 1 else x
    pe_f = pe.reshape(pe.shape[0] // k, E_eff) if k > 1 else pe

    bb, tl = _pick_tiles(N, L_eff, E_eff)

    # pe input: pass the full buffer (no XLA slice copy) whenever the tile rows
    # are a multiple of 8 (BlockSpec legal against the big buffer).  Only the
    # tiny-sequence case slices, and then it is a handful of rows.
    pe_in = pe_f if (tl % 8 == 0) else pe_f[:L_eff]

    n_seq = pl.cdiv(L_eff, tl)
    n_bat = pl.cdiv(N, bb)
    if n_seq == 1 and n_bat > 1:
        # Single seq tile: pe block index is constant anyway (never re-fetched);
        # put batch first so the leading parallel axis has extent >= 2 (v7x TCs).
        grid = (n_bat, n_seq)
        x_map = lambda b, s: (b, s, 0)
        pe_map = lambda b, s: (s, 0)
    else:
        # Seq leading, batch innermost: consecutive steps keep the same pe block
        # index, so the pe table is DMA'd once per seq tile instead of N times.
        grid = (n_seq, n_bat)
        x_map = lambda s, b: (b, s, 0)
        pe_map = lambda s, b: (s, 0)

    out = pl.pallas_call(
        functools.partial(_pos_enc_kernel, scale=scale),
        out_shape=jax.ShapeDtypeStruct((N, L_eff, E_eff), x.dtype),
        grid=grid,
        in_specs=[
            pl.BlockSpec((bb, tl, E_eff), x_map),    # x tile
            pl.BlockSpec((tl, E_eff), pe_map),       # pe tile (shared over batch)
        ],
        out_specs=pl.BlockSpec((bb, tl, E_eff), x_map),
        compiler_params=pltpu.CompilerParams(
            dimension_semantics=("parallel", "parallel"),
            vmem_limit_bytes=32 * 1024 * 1024),
    )(x_f, pe_in)

    return out.reshape(N, L, E) if k > 1 else out


# ------------------------------------ demo ------------------------------------

if __name__ == "__main__":
    d_model = 32
    max_seq_len = 2048        # PyTorch default
    batch, seq_len = 2, 8     # forward uses x.size(1)

    key = jax.random.PRNGKey(0)
    x = jax.random.normal(key, (batch, seq_len, d_model), jnp.float32)

    pe = make_pe_table(max_seq_len, d_model)     # "register_buffer" equivalent

    out = positional_encoder_forward(x, pe, d_model)
    out = jax.block_until_ready(out)

    # Pure-JAX reference (same math: scale then broadcast add of pe[:seq_len]).
    ref = x * math.sqrt(d_model) + pe[:seq_len][None, :, :]
    assert out.shape == (batch, seq_len, d_model)
    assert bool(jnp.all(jnp.isfinite(out)))
    assert jnp.allclose(out, ref, atol=1e-5, rtol=1e-5)

    print("KERNEL_OK")
</pallas_src>

<mosaic_0001>
module attributes {stable_mosaic.version = 11 : i64} {
  func.func @_pos_enc_kernel(%arg0: i32, %arg1: i32, %arg2: memref<2x2x128xf32, #tpu.memory_space<vmem>>, %arg3: memref<2x128xf32, #tpu.memory_space<vmem>>, %arg4: memref<2x2x128xf32, #tpu.memory_space<vmem>>) attributes {dimension_semantics = [#tpu.dimension_semantics<parallel>, #tpu.dimension_semantics<parallel>], iteration_bounds = array<i64: 1, 1>, scalar_prefetch = 0 : i64, scratch_operands = 0 : i64, tpu.core_type = #tpu.core_type<tc>, window_params = [{transform_indices = @transform_0, window_bounds = array<i64: 2, 2, 128>}, {transform_indices = @transform_1, window_bounds = array<i64: 2, 128>}, {transform_indices = @transform_2, window_bounds = array<i64: 2, 2, 128>}]} {
    %c0 = arith.constant 0 : index
    %c0_0 = arith.constant 0 : index
    %c0_1 = arith.constant 0 : index
    %0 = vector.load %arg2[%c0, %c0_0, %c0_1] : memref<2x2x128xf32, #tpu.memory_space<vmem>>, vector<2x2x128xf32>
    %cst = arith.constant 5.65685415 : f32
    %1 = vector.broadcast %cst : f32 to vector<2x2x128xf32>
    %2 = arith.mulf %0, %1 : vector<2x2x128xf32>
    %c0_2 = arith.constant 0 : index
    %c0_3 = arith.constant 0 : index
    %3 = vector.load %arg3[%c0_2, %c0_3] : memref<2x128xf32, #tpu.memory_space<vmem>>, vector<2x128xf32>
    %4 = vector.shape_cast %3 : vector<2x128xf32> to vector<1x2x128xf32>
    %5 = vector.broadcast %4 : vector<1x2x128xf32> to vector<2x2x128xf32>
    %6 = arith.addf %2, %5 : vector<2x2x128xf32>
    %c0_4 = arith.constant 0 : index
    %c0_5 = arith.constant 0 : index
    %c0_6 = arith.constant 0 : index
    %7 = vector.load %arg4[%c0_4, %c0_5, %c0_6] : memref<2x2x128xf32, #tpu.memory_space<vmem>>, vector<2x2x128xf32>
    tpu.vector_store %arg4[%c0_4, %c0_5, %c0_6], %6 {strides = array<i32>} : memref<2x2x128xf32, #tpu.memory_space<vmem>>, vector<2x2x128xf32>,
    return
  }
  func.func @transform_0(%arg0: i32, %arg1: i32) -> (i32, i32, i32) {
    %c0_i32 = arith.constant 0 : i32
    %c0_i32_0 = arith.constant 0 : i32
    return %arg1, %arg0, %c0_i32 : i32, i32, i32
  }
  func.func @transform_1(%arg0: i32, %arg1: i32) -> (i32, i32) {
    %c0_i32 = arith.constant 0 : i32
    %c0_i32_0 = arith.constant 0 : i32
    return %arg0, %c0_i32 : i32, i32
  }
  func.func @transform_2(%arg0: i32, %arg1: i32) -> (i32, i32, i32) {
    %c0_i32 = arith.constant 0 : i32
    %c0_i32_0 = arith.constant 0 : i32
    return %arg1, %arg0, %c0_i32 : i32, i32, i32
  }
}

</mosaic_0001>

<llo_original>
// kernel: tpu_custom_call.1
$region0: #{tpu_custom_call.1}
  #allocation0 [shape = 'u32[]', space=smem, size = 0x4, offset = 0x4, fixed_abs, tag = 'smem constant byte address 0x4 - core index']
  #allocation1 [shape = 'u32[144,128]{1,0:T(1,128)}', space=vmem, size = 0x12000, scoped, tag = 'internal scratch']
  %s0 = inlined_call_operand.hbm [shape: f32[2,2,128], index: 0, kind: input, shape index: {}]
  %s1 = inlined_call_operand.hbm [shape: f32[2,128], index: 1, kind: input, shape index: {}]
  %s2 = inlined_call_operand.hbm [shape: f32[2,2,128], index: 2, kind: output, shape index: {}]
  %s3 = sld [smem:[#allocation0]]
  $region26: #{tpu_custom_call.1} parent=0
    _
  %s5 = ssub.s32 1, %s3
  %s6 = scalar_select 0, %s5, %s3
  $region1: #{tpu_custom_call.1} parent=0
    #allocation2 [shape = 'u8[2048]{0}', space=vmem, size = 0x800, scoped, tag = 'input window, operand 0, single buffered']
    #allocation3 [shape = 's32[1]{0}', space=sflag, size = 0x4, scoped, tag = 'scoped memory for tpu_custom_call.1']
    #allocation4 [shape = 's32[1]{0}', space=sflag, size = 0x4, scoped, tag = 'scoped memory for tpu_custom_call.1']
    #allocation5 [shape = 'u8[1024]{0}', space=vmem, size = 0x400, scoped, tag = 'input window, operand 1, single buffered']
    #allocation6 [shape = 's32[1]{0}', space=sflag, size = 0x4, scoped, tag = 'scoped memory for tpu_custom_call.1']
    #allocation7 [shape = 'u8[2048]{0}', space=vmem, size = 0x800, scoped, tag = 'output window, operand 0, single buffered']
    %7 = vsyncpa [#allocation3], 0
    %8 = vsyncpa [#allocation6], 0
    %9 = vsyncpa [#allocation4], 0
    // Predicated region
    $region2: #{tpu_custom_call.1} parent=1 // pred_check
      _
    $region3: #{tpu_custom_call.1} parent=1 // pred_check_branch
      %11 = sbr.rel (0) target = $region5
    $region4: #{tpu_custom_call.1} parent=1 // pred_region
      %s13 = ssub.s32 64, 64
      %14 = vsyncadd [#allocation3], %s13
      %s15 = sshll.u32 [#allocation2], 4
      %s16 = int_to_ptr.vmem [resolvable:$true] %s15
      %21 = dma.hbm_to_vmem [thread:$0]  %s0, 64, %s16, [#allocation3], 32, 32, 2
    $region5: #{tpu_custom_call.1} parent=1 // pred_fallthru
      _
    // Predicated region
    $region6: #{tpu_custom_call.1} parent=1 // pred_check
      _
    $region7: #{tpu_custom_call.1} parent=1 // pred_check_branch
      %23 = sbr.rel (0) target = $region9
    $region8: #{tpu_custom_call.1} parent=1 // pred_region
      %s25 = ssub.s32 32, 32
      %26 = vsyncadd [#allocation6], %s25
      %s28 = sshll.u32 [#allocation5], 4
      %s29 = int_to_ptr.vmem [resolvable:$true] %s28
      %31 = dma.hbm_to_vmem [thread:$0]  %s1, 32, %s29, [#allocation6]
    $region9: #{tpu_custom_call.1} parent=1 // pred_fallthru
      _
    // Predicated region
    $region10: #{tpu_custom_call.1} parent=1 // pred_check
      _
    $region11: #{tpu_custom_call.1} parent=1 // pred_check_branch
      %33 = sbr.rel (0) target = $region13
    $region12: #{tpu_custom_call.1} parent=1 // pred_region
      %34 = dma.done [#allocation3], 64
    $region13: #{tpu_custom_call.1} parent=1 // pred_fallthru
      _
    // Predicated region
    $region14: #{tpu_custom_call.1} parent=1 // pred_check
      _
    $region15: #{tpu_custom_call.1} parent=1 // pred_check_branch
      %36 = sbr.rel (0) target = $region17
    $region16: #{tpu_custom_call.1} parent=1 // pred_region
      %37 = dma.done [#allocation6], 32
    $region17: #{tpu_custom_call.1} parent=1 // pred_fallthru
      _
    %v38 = vld [vmem:[#allocation2] sm:$0x3]
    %v39 = vld [vmem:[#allocation2 + $0x2] sm:$0x3]
    %v40 = vmul.f32 %v38, 5.656854
    %v41 = vmul.f32 %v39, 5.656854
    %v42 = vld [vmem:[#allocation5] sm:$0x3]
    %v43 = vadd.f32 %v40, %v42
    %v44 = vadd.f32 %v41, %v42
    %45 = vst [vmem:[#allocation7] sm:$0x3] %v43
    %46 = vst [vmem:[#allocation7 + $0x2] sm:$0x3] %v44
    // Predicated region
    $region18: #{tpu_custom_call.1} parent=1 // pred_check
      _
    $region19: #{tpu_custom_call.1} parent=1 // pred_check_branch
      %48 = sbr.rel (0) target = $region21
    $region20: #{tpu_custom_call.1} parent=1 // pred_region
      %s50 = ssub.s32 64, 64
      %51 = vsyncadd [#allocation4], %s50
      %s52 = sshll.u32 [#allocation7], 4
      %s53 = int_to_ptr.vmem [resolvable:$true] %s52
      %58 = dma.vmem_to_hbm [thread:$0]  %s53, 64, %s2, [#allocation4], 32, 32, 2
    $region21: #{tpu_custom_call.1} parent=1 // pred_fallthru
      _
    // Predicated region
    $region22: #{tpu_custom_call.1} parent=1 // pred_check
      _
    $region23: #{tpu_custom_call.1} parent=1 // pred_check_branch
      %60 = sbr.rel (0) target = $region25
    $region24: #{tpu_custom_call.1} parent=1 // pred_region
      %61 = dma.done [#allocation4], 64
    $region25: #{tpu_custom_call.1} parent=1 // pred_fallthru
      _
    %62 = vsyncpa [#allocation3], 1
    %63 = vsyncpa [#allocation6], 1
    %64 = vsyncpa [#allocation4], 1

</llo_original>
